<compile_context>
chip_gen: v5e
topology: v5e:2x2
jax: 0.10.0
libtpu: 0.0.40
codegen_flags: <defaults>
</compile_context>

<pallas_src>
import numpy as np
import jax
import jax.numpy as jnp
from jax.experimental import pallas as pl
from jax.experimental.pallas import tpu as pltpu

# ---- static geometry (mirrors Detector.__init__ with small sizes) ----
SIZE = 64
DET_X = 16          # det_size_x
DET_Y = 32          # det_size_y
PAD = 8
CENTER_X = (SIZE - DET_Y) // 2            # 16   (row start of both windows)
TOP_Y = 0 + PAD                           # 8    (col start of window 0)
BOTTOM_Y = SIZE - DET_X - PAD             # 40   (col start of window 1)
X_LOC = (CENTER_X, CENTER_X)              # (16, 16)
Y_LOC = (TOP_Y, BOTTOM_Y)                 # (8, 40)
DET = DET_X                               # detector window is DET x DET
_ROW_BLOCK_IDX = CENTER_X // DET          # 1  (the 16-row band rows 16..31)
_INV_N = 1.0 / float(DET * DET)

# Constant "selection + difference" matrix: col @ SEL = (d0 - d1, d1 - d0)
# where d_i = mean over detector window i of |x| (mode='mean' scale folded in).
_SEL_NP = np.zeros((SIZE, 2), dtype=np.float32)
_SEL_NP[Y_LOC[0]:Y_LOC[0] + DET, 0] += _INV_N   # +window0 into logit diff 0
_SEL_NP[Y_LOC[1]:Y_LOC[1] + DET, 0] -= _INV_N   # -window1 into logit diff 0
_SEL_NP[:, 1] = -_SEL_NP[:, 0]                  # logit diff 1 = -(d0 - d1)


def detector_kernel(x_ref, sel_ref, o_ref):
    # x_ref : (TB, DET, SIZE) f32 — only the 16-row band containing both windows
    # sel_ref: (SIZE, 2) f32 constant selection/difference matrix
    # o_ref : (TB, 2) f32 probabilities
    band = jnp.abs(x_ref[...])                         # intensity_mode=False -> |x|
    col = jnp.sum(band, axis=1)                        # (TB, SIZE): sublane reduce
    # MXU: (TB, SIZE) @ (SIZE, 2) -> (TB, 2) == (d0 - d1, d1 - d0)
    z = jnp.dot(col, sel_ref[...], preferred_element_type=jnp.float32)
    # softmax over 2 classes == sigmoid of logit differences; single store.
    o_ref[...] = jax.nn.sigmoid(z)


def _pick_batch_tile(B):
    # Tiny batches: one step, block == full batch dim (always layout-legal).
    if B <= 32:
        return B
    # Aim for >= 4 grid steps (>= 2 per TensorCore on v7x) so the "parallel"
    # batch axis actually shards and the DMA/compute pipeline engages.
    tb = 8 * pl.cdiv(B, 4 * 8)                 # multiple of 8
    # Cap: padded (64->128 lane) footprint is TB*16*128*4B per buffer;
    # TB=1024 -> 8 MiB/buffer, 16 MiB double-buffered (fits all gens with
    # vmem_limit_bytes=32 MiB; well under v7x's 64 MiB physical VMEM).
    return max(8, min(tb, 1024))


def detector_forward(x):
    B, H, W = x.shape
    assert H == SIZE and W == SIZE
    TB = _pick_batch_tile(B)
    grid = (pl.cdiv(B, TB),)
    sel = jnp.asarray(_SEL_NP)
    return pl.pallas_call(
        detector_kernel,
        out_shape=jax.ShapeDtypeStruct((B, 2), jnp.float32),
        grid=grid,
        in_specs=[
            # Fetch only rows [CENTER_X, CENTER_X+DET) of each image.
            pl.BlockSpec((TB, DET, SIZE), lambda i: (i, _ROW_BLOCK_IDX, 0)),
            # Tiny constant matrix, same block every step.
            pl.BlockSpec((SIZE, 2), lambda i: (0, 0)),
        ],
        out_specs=pl.BlockSpec((TB, 2), lambda i: (i, 0)),
        compiler_params=pltpu.CompilerParams(
            dimension_semantics=("parallel",),
            vmem_limit_bytes=32 * 1024 * 1024,
        ),
    )(x, sel)


def detector_reference(x):
    # pure-JAX reference for correctness checking (mirrors the PyTorch forward)
    xa = jnp.abs(x)
    ds = []
    for i in range(2):
        r = xa[:, X_LOC[i]:X_LOC[i] + DET, Y_LOC[i]:Y_LOC[i] + DET]
        ds.append(jnp.mean(r, axis=(1, 2))[:, None])
    d = jnp.concatenate(ds, axis=-1)
    return jax.nn.softmax(d, axis=-1)


if __name__ == "__main__":
    key = jax.random.PRNGKey(0)

    # Primary small test (matches the module spec at reduced size).
    B = 2
    x = jax.random.normal(key, (B, SIZE, SIZE), dtype=jnp.float32)
    out = jax.block_until_ready(detector_forward(x))
    ref = detector_reference(x)
    assert out.shape == (B, 2), out.shape
    assert jnp.allclose(out, ref, atol=1e-5, rtol=1e-5), (out, ref)

    # Secondary test: multi-step grid with a partial last batch tile.
    B2 = 40
    x2 = jax.random.normal(jax.random.PRNGKey(1), (B2, SIZE, SIZE), dtype=jnp.float32)
    out2 = jax.block_until_ready(detector_forward(x2))
    ref2 = detector_reference(x2)
    assert out2.shape == (B2, 2), out2.shape
    assert jnp.allclose(out2, ref2, atol=1e-5, rtol=1e-5), (out2, ref2)

    print("KERNEL_OK")
</pallas_src>

<mosaic_0001>
module attributes {stable_mosaic.version = 11 : i64} {
  func.func @detector_kernel(%arg0: i32, %arg1: memref<2x16x64xf32, #tpu.memory_space<vmem>>, %arg2: memref<64x2xf32, #tpu.memory_space<vmem>>, %arg3: memref<2x2xf32, #tpu.memory_space<vmem>>) attributes {dimension_semantics = [#tpu.dimension_semantics<parallel>], iteration_bounds = array<i64: 1>, scalar_prefetch = 0 : i64, scratch_operands = 0 : i64, tpu.core_type = #tpu.core_type<tc>, window_params = [{transform_indices = @transform_0, window_bounds = array<i64: 2, 16, 64>}, {pipeline_mode = #tpu.pipeline_mode<synchronous>, transform_indices = @transform_1, window_bounds = array<i64: 64, 2>}, {transform_indices = @transform_2, window_bounds = array<i64: 2, 2>}]} {
    %c0 = arith.constant 0 : index
    %c0_0 = arith.constant 0 : index
    %c0_1 = arith.constant 0 : index
    %0 = vector.load %arg1[%c0, %c0_0, %c0_1] : memref<2x16x64xf32, #tpu.memory_space<vmem>>, vector<2x16x64xf32>
    %1 = math.absf %0 : vector<2x16x64xf32>
    %cst = arith.constant dense<0.000000e+00> : vector<2x64xf32>
    %2 = vector.multi_reduction <add>, %1, %cst [1] : vector<2x16x64xf32> to vector<2x64xf32>
    %c0_2 = arith.constant 0 : index
    %c0_3 = arith.constant 0 : index
    %3 = vector.load %arg2[%c0_2, %c0_3] : memref<64x2xf32, #tpu.memory_space<vmem>>, vector<64x2xf32>
    %cst_4 = arith.constant dense<0.000000e+00> : vector<2x2xf32>
    %4 = tpu.matmul %2, %3, %cst_4 {dimension_numbers = #tpu.dot_dimension_numbers<[1], [0], [0], [1], [0, 0, 1, 1], [], []>} : vector<2x64xf32>, vector<64x2xf32>, vector<2x2xf32> -> vector<2x2xf32>
    %5 = arith.negf %4 : vector<2x2xf32>
    %6 = math.exp %5 : vector<2x2xf32>
    %cst_5 = arith.constant 1.000000e+00 : f32
    %7 = vector.broadcast %cst_5 : f32 to vector<2x2xf32>
    %8 = arith.addf %7, %6 : vector<2x2xf32>
    %9 = arith.divf %7, %8 : vector<2x2xf32>
    %c0_6 = arith.constant 0 : index
    %c0_7 = arith.constant 0 : index
    %10 = vector.load %arg3[%c0_6, %c0_7] : memref<2x2xf32, #tpu.memory_space<vmem>>, vector<2x2xf32>
    tpu.vector_store %arg3[%c0_6, %c0_7], %9 {strides = array<i32>} : memref<2x2xf32, #tpu.memory_space<vmem>>, vector<2x2xf32>,
    return
  }
  func.func @transform_0(%arg0: i32) -> (i32, i32, i32) {
    %c1_i32 = arith.constant 1 : i32
    %c0_i32 = arith.constant 0 : i32
    %c0_i32_0 = arith.constant 0 : i32
    return %arg0, %c1_i32, %c0_i32 : i32, i32, i32
  }
  func.func @transform_1(%arg0: i32) -> (i32, i32) {
    %c0_i32 = arith.constant 0 : i32
    %c0_i32_0 = arith.constant 0 : i32
    %c0_i32_1 = arith.constant 0 : i32
    return %c0_i32, %c0_i32_0 : i32, i32
  }
  func.func @transform_2(%arg0: i32) -> (i32, i32) {
    %c0_i32 = arith.constant 0 : i32
    %c0_i32_0 = arith.constant 0 : i32
    return %arg0, %c0_i32 : i32, i32
  }
}

</mosaic_0001>

<llo_original>
// kernel: tpu_custom_call.1
$region0: #{tpu_custom_call.1}
  #allocation0 [shape = 'u32[]', space=smem, size = 0x4, offset = 0x4, fixed_abs, tag = 'smem constant byte address 0x4 - core index']
  #allocation1 [shape = 'u32[72,128]{1,0:T(1,128)}', space=vmem, size = 0x9000, scoped, tag = 'internal scratch']
  #allocation6 [shape = 's32[]', space=sflag, size = 0x4, offset = 0, fixed_abs, tag = 'sflag constant byte address 0x0 - dummy sync flag']
  %s0 = inlined_call_operand.hbm [shape: f32[2,64,64], index: 0, kind: input, shape index: {}]
  %s1 = inlined_call_operand.vmem [shape: f32[64,2], index: 1, kind: input, shape index: {}]
  %s2 = inlined_call_operand.hbm [shape: f32[2,2], index: 2, kind: output, shape index: {}]
  %s3 = sld [smem:[#allocation0]]
  $region22: #{tpu_custom_call.1} parent=0
    _
  %s5 = ssub.s32 1, %s3
  %s6 = scalar_select 0, %s5, %s3
  $region1: #{tpu_custom_call.1} parent=0
    #allocation2 [shape = 'u8[16384]{0}', space=vmem, size = 0x4000, scoped, tag = 'input window, operand 0, single buffered']
    #allocation3 [shape = 's32[1]{0}', space=sflag, size = 0x4, scoped, tag = 'scoped memory for tpu_custom_call.1']
    #allocation4 [shape = 's32[1]{0}', space=sflag, size = 0x4, scoped, tag = 'scoped memory for tpu_custom_call.1']
    #allocation5 [shape = 'u8[1024]{0}', space=vmem, size = 0x400, scoped, tag = 'output window, operand 0, single buffered']
    %7 = vsyncpa [#allocation3], 0
    %8 = vsyncpa [#allocation4], 0
    // Predicated region
    $region2: #{tpu_custom_call.1} parent=1 // pred_check
      _
    $region3: #{tpu_custom_call.1} parent=1 // pred_check_branch
      %10 = sbr.rel (0) target = $region5
    $region4: #{tpu_custom_call.1} parent=1 // pred_region
      #allocation7 [shape = 'u32[6]{0}', space=smem, size = 0x18, scoped, tag = 'DMA stride descriptor']
      %12 = vsyncadd [#allocation3], 0
      %s13 = scalar_lea.hbm %s0, 16
      %s15 = sshll.u32 1, 14
      %s16 = sxor.u32 4294967295, %s15
      %s18 = sld [smem:[#allocation0]]
      %s19 = sadd.s32 2, %s18
      %s21 = sshll.u32 7, 26
      %s22 = sxor.u32 4294967295, %s21
      %s23 = sand.u32 0, %s22
      %s24 = sshll.u32 %s19, 26
      %s25 = sor.u32 %s23, %s24
      %s26 = sshll.u32 %s13, 4
      %s27 = int_to_ptr.hbm [resolvable:$true] %s26
      %s28 = sshll.u32 [#allocation2], 4
      %s29 = int_to_ptr.vmem [resolvable:$true] %s28
      %35 = sst [smem:[#allocation7]] 1024
      %s36 = scalar_lea.smem [#allocation7], 1
      %37 = sst [smem:[%s36]] 256
      %s38 = scalar_lea.smem [#allocation7], 2
      %39 = sst [smem:[%s38]] 2
      %s40 = scalar_lea.smem [#allocation7], 3
      %41 = sst [smem:[%s40]] 128
      %s42 = scalar_lea.smem [#allocation7], 4
      %43 = sst [smem:[%s42]] 128
      %s44 = scalar_lea.smem [#allocation7], 5
      %45 = sst [smem:[%s44]] 8
      %47 = dma.general %s27, 512, %s29, [#allocation3], [#allocation6], [#allocation7], %s25, 0
    $region5: #{tpu_custom_call.1} parent=1 // pred_fallthru
      _
    // Predicated region
    $region6: #{tpu_custom_call.1} parent=1 // pred_check
      _
    $region7: #{tpu_custom_call.1} parent=1 // pred_check_branch
      %49 = sbr.rel (0) target = $region9
    $region8: #{tpu_custom_call.1} parent=1 // pred_region
      _
    $region9: #{tpu_custom_call.1} parent=1 // pred_fallthru
      _
    // Predicated region
    $region10: #{tpu_custom_call.1} parent=1 // pred_check
      _
    $region11: #{tpu_custom_call.1} parent=1 // pred_check_branch
      %51 = sbr.rel (0) target = $region13
    $region12: #{tpu_custom_call.1} parent=1 // pred_region
      %53 = dma.done [#allocation3], 512
    $region13: #{tpu_custom_call.1} parent=1 // pred_fallthru
      _
    %v54 = vld [vmem:[#allocation2] sm:$0xff]
    %v55 = vld [vmem:[#allocation2 + $0x8] sm:$0xff]
    %v56 = vld [vmem:[#allocation2 + $0x10] sm:$0xff]
    %v57 = vld [vmem:[#allocation2 + $0x18] sm:$0xff]
    %v58 = vand.u32 2147483647, %v54
    %v59 = vand.u32 2147483647, %v55
    %v60 = vand.u32 2147483647, %v56
    %v61 = vand.u32 2147483647, %v57
    %vm62 = vcmask 523264
    %v63 = vsel %vm62, %v58, 0.0
    %v64 = vsel %vm62, %v59, 0.0
    %v65 = vadd.f32 %v63, %v64
    %v66 = vrot.slane %v65, 4
    %v67 = vadd.f32 %v65, %v66
    %v68 = vrot.slane %v67, 2
    %v69 = vadd.f32 %v67, %v68
    %v70 = vrot.slane %v69, 1
    %v71 = vadd.f32 %v69, %v70
    %v72 = vsel %vm62, %v60, 0.0
    %v73 = vsel %vm62, %v61, 0.0
    %v74 = vadd.f32 %v72, %v73
    %v75 = vrot.slane %v74, 4
    %v76 = vadd.f32 %v74, %v75
    %v77 = vrot.slane %v76, 2
    %v78 = vadd.f32 %v76, %v77
    %v79 = vrot.slane %v78, 1
    %v80 = vadd.f32 %v78, %v79
    %v81 = vld [vmem:[%s1] sm:$0xff]
    %v82 = vld [vmem:[%s1 + $0x8] sm:$0xff]
    %v83 = vld [vmem:[%s1 + $0x10] sm:$0xff]
    %v84 = vld [vmem:[%s1 + $0x18] sm:$0xff]
    %v85 = vld [vmem:[%s1 + $0x20] sm:$0xff]
    %v86 = vld [vmem:[%s1 + $0x28] sm:$0xff]
    %v87 = vld [vmem:[%s1 + $0x30] sm:$0xff]
    %v88 = vld [vmem:[%s1 + $0x38] sm:$0xff]
    %vm91 = vcmask 1041409
    %v92 = vsel %vm91, %v80, %v71
    %v93 = vsel %vm62, %v92, 0
    %95 = vmatpush.msra.mxu0 0.0
    %96 = vmatpush.msra.mxu0 0.0
    %97 = vmatpush.msra.mxu0 0.0
    %98 = vmatpush.msra.mxu0 0.0
    %99 = vmatpush.msra.mxu0 0.0
    %100 = vmatpush.msra.mxu0 0.0
    %101 = vmatpush.msra.mxu0 0.0
    %102 = vmatpush.msra.mxu0 0.0
    %103 = vmatpush.msra.mxu0 %v88
    %104 = vmatpush.msra.mxu0 %v87
    %105 = vmatpush.msra.mxu0 %v86
    %106 = vmatpush.msra.mxu0 %v85
    %107 = vmatpush.msra.mxu0 %v84
    %108 = vmatpush.msra.mxu0 %v83
    %109 = vmatpush.msra.mxu0 %v82
    %110 = vmatpush.msra.mxu0 %v81
    %111 = vmatmul.f32.gmra.mxu0 %v93
    %v112 = vpop.f32.mrf.mxu0
    %v113 = vadd.f32 0.0, %v112
    %114 = vdwg.mxu0
    %v115 = vxor.u32 %v113, 2147483648
    %v116 = vmul.f32 %v115, 1.442695
    %v117 = vpow.pop %v116
    %v118 = vadd.f32 %v117, 1.0
    %v119 = vrcp.pop %v118
    %v120 = vmul.f32 %v118, %v119
    %v121 = vsub.f32 1.0, %v120
    %v122 = vmul.f32 %v119, %v121
    %v123 = vadd.f32 %v119, %v122
    %vm124 = vweird.f32 %v118
    %vm125 = vweird.f32 %v119
    %vm126 = vmor %vm124, %vm125
    %v127 = vsel %vm126, %v119, %v123
    %v128 = vand.u32 2147483647, %v118
    %vm129 = vcmp.eq.f32.partialorder %v128, 8.507059e+37
    %v130 = vand.u32 %v118, 2147483648
    %v131 = vor.u32 1.1754944e-38, %v130
    %v132 = vsel %vm129, %v131, %v127
    %v133 = vmul.f32 1.0, %v132
    %vm134 = vcmask 9216
    %135 = vst.msk [vmem:[#allocation5] sm:$0x3] %vm134, %v133
    // Predicated region
    $region14: #{tpu_custom_call.1} parent=1 // pred_check
      _
    $region15: #{tpu_custom_call.1} parent=1 // pred_check_branch
      %137 = sbr.rel (0) target = $region17
    $region16: #{tpu_custom_call.1} parent=1 // pred_region
      %139 = vsyncadd [#allocation4], 0
      %s141 = sshll.u32 [#allocation5], 4
      %s142 = int_to_ptr.vmem [resolvable:$true] %s141
      %s143 = sshll.u32 %s2, 4
      %s144 = int_to_ptr.hbm [resolvable:$true] %s143
      %146 = dma.vmem_to_hbm [thread:$0]  %s142, 32, %s144, [#allocation4]
    $region17: #{tpu_custom_call.1} parent=1 // pred_fallthru
      _
    // Predicated region
    $region18: #{tpu_custom_call.1} parent=1 // pred_check
      _
    $region19: #{tpu_custom_call.1} parent=1 // pred_check_branch
      %148 = sbr.rel (0) target = $region21
    $region20: #{tpu_custom_call.1} parent=1 // pred_region
      %150 = dma.done [#allocation4], 32
    $region21: #{tpu_custom_call.1} parent=1 // pred_fallthru
      _
    %151 = vsyncpa [#allocation3], 1
    %152 = vsyncpa [#allocation4], 1

</llo_original>
